<compile_context>
chip_gen: v7x
topology: tpu7x:2x2x1
jax: 0.10.0
libtpu: 0.0.40
codegen_flags: <defaults>
</compile_context>

<pallas_src>
import functools

import numpy as np
import jax
import jax.numpy as jnp
from jax import lax
from jax.experimental import pallas as pl
from jax.experimental.pallas import tpu as pltpu

_LANES = 128
_SUBLANES = 8
# 2048 x 128 f32 = 1 MiB per block; with double-buffered in + out that is
# ~4 MiB of VMEM, comfortably inside the 32 MiB scoped limit on v5e/v6e/v7x
# (v7x only has 64 MiB physical VMEM, so we size explicitly instead of
# assuming 128 MiB).
_MAX_BLOCK_ROWS = 2048
_VMEM_LIMIT_BYTES = 32 * 1024 * 1024


def _compiler_params():
    # Blocks are fully independent -> "parallel" lets v7x shard the grid axis
    # across its two TensorCores (measured-neutral on v5e/v6e, so safe always).
    return pltpu.CompilerParams(
        dimension_semantics=("parallel",),
        vmem_limit_bytes=_VMEM_LIMIT_BYTES,
    )


def _padded_layout(n_elems):
    """Rows of the padded (rows, 128) layout and the block row count."""
    rows = -(-n_elems // _LANES)
    rows = max(_SUBLANES, -(-rows // _SUBLANES) * _SUBLANES)
    if rows <= _MAX_BLOCK_ROWS:
        return rows, rows                      # single block, grid=(1,)
    rows = -(-rows // _MAX_BLOCK_ROWS) * _MAX_BLOCK_ROWS
    return rows, _MAX_BLOCK_ROWS


# ----------------------------- kernels --------------------------------------

def _clamp_kernel(g_ref, o_ref, *, lo, hi):
    o_ref[...] = jnp.clip(g_ref[...], lo, hi)


def _quantize_kernel(g_ref, o_ref, *, left, width, inv_width, center0, n_bins):
    x = g_ref[...]
    # Closed-form uniform-bin index: ~4 VPU ops/element regardless of n_bins
    # (replaces the old O(n_bins) unrolled compare loop).
    idx = jnp.floor((x - jnp.float32(left)) * jnp.float32(inv_width))
    # Exact edge correction so the result matches
    # torch.bucketize(x, edges, right=True) - 1 even for values sitting exactly
    # on a bin edge (edges are dyadic since n_bins is a power of two, so
    # left + k*width is exact in f32 and the two conditions are exclusive).
    edge_lo = jnp.float32(left) + idx * jnp.float32(width)
    idx = jnp.where(x < edge_lo, idx - 1.0, idx)
    idx = jnp.where(x >= edge_lo + jnp.float32(width), idx + 1.0, idx)
    idx = jnp.clip(idx, 0.0, float(n_bins - 1))
    # centers[i] = center0 + i * width
    o_ref[...] = jnp.float32(center0) + idx * jnp.float32(width)


def _uniform_from_index(gidx, seed):
    """Stateless counter hash -> uniform float32 in [0, 1).

    splitmix32-style mixing using only int32 VPU ops, so it lowers on the
    Mosaic TPU backend *and* in Pallas interpret mode (unlike pltpu.prng_*).
    The draw depends only on (global element index, seed), so it is identical
    for any block size / grid decomposition.
    """
    x = gidx ^ (seed * jnp.int32(-1640531527))            # 0x9E3779B9
    x = (x ^ (x >> 16)) * jnp.int32(0x7FEB352D)
    x = (x ^ (x >> 15)) * jnp.int32(-2073385333)          # 0x846CA68B
    x = x ^ (x >> 16)
    bits24 = jnp.bitwise_and(x, jnp.int32(0x00FFFFFF))    # [0, 2^24)
    return bits24.astype(jnp.float32) * jnp.float32(1.0 / 16777216.0)


def _simquant_kernel(seed_ref, g_ref, o_ref, *, n_bins, block_rows):
    shape = g_ref.shape
    row0 = pl.program_id(0) * block_rows
    rows = lax.broadcasted_iota(jnp.int32, shape, 0) + row0
    cols = lax.broadcasted_iota(jnp.int32, shape, 1)
    gidx = rows * jnp.int32(_LANES) + cols                 # global element idx
    u = _uniform_from_index(gidx, seed_ref[0])             # U[0, 1)
    noise = u * jnp.float32(1.0 / n_bins) - jnp.float32(1.0 / (2 * n_bins))
    o_ref[...] = g_ref[...] + noise


# ----------------------------- launchers ------------------------------------

def _launch_elementwise(kernel, x2d, block_rows, *, in_place=False):
    rows = x2d.shape[0]
    return pl.pallas_call(
        kernel,
        out_shape=jax.ShapeDtypeStruct(x2d.shape, x2d.dtype),
        grid=(rows // block_rows,),
        in_specs=[pl.BlockSpec((block_rows, _LANES), lambda i: (i, 0))],
        out_specs=pl.BlockSpec((block_rows, _LANES), lambda i: (i, 0)),
        input_output_aliases={0: 0} if in_place else {},
        compiler_params=_compiler_params(),
    )(x2d)


def _launch_simquant(seed_arr, x2d, n_bins, block_rows):
    rows = x2d.shape[0]
    kern = functools.partial(_simquant_kernel, n_bins=n_bins,
                             block_rows=block_rows)
    return pl.pallas_call(
        kern,
        out_shape=jax.ShapeDtypeStruct(x2d.shape, x2d.dtype),
        grid=(rows // block_rows,),
        in_specs=[
            pl.BlockSpec(memory_space=pltpu.MemorySpace.SMEM),   # scalar seed
            pl.BlockSpec((block_rows, _LANES), lambda i: (i, 0)),
        ],
        out_specs=pl.BlockSpec((block_rows, _LANES), lambda i: (i, 0)),
        compiler_params=_compiler_params(),
    )(seed_arr, x2d)


# ----------------------------- module ---------------------------------------

class GridPallas:
    """JAX/Pallas port of the PyTorch `Grid` base module."""

    def __init__(self, channels, h, w, quantization, circular=False, key=None):
        self.h = h
        self.w = w
        self.channels = channels
        self.n_quant_bins = 2 ** quantization
        self.quant_left = -(self.n_quant_bins - 1) / (2 * self.n_quant_bins)
        self.quant_right = self.n_quant_bins / (2 * self.n_quant_bins)
        self.circular = circular
        self.frozen = False

        self._shape = (1, channels, h, w)
        self._n = channels * h * w
        self._rows, self._block_rows = _padded_layout(self._n)

        key = jax.random.PRNGKey(0) if key is None else key
        # nn.Parameter(torch.randn(1, C, H, W) / 100), deterministic init,
        # stored once in the padded lane-dense (rows, 128) layout.
        init = jax.random.normal(key, (self._n,), dtype=jnp.float32) / 100.0
        flat = jnp.pad(init, (0, self._rows * _LANES - self._n))
        self._grid2d = flat.reshape(self._rows, _LANES)

    # ---- NCHW view of the learned parameter (materialised on demand) -------
    @property
    def grid(self):
        return self._grid2d.reshape(-1)[: self._n].reshape(self._shape)

    def simulate_quantization(self, seed=0):
        seed_arr = jnp.asarray([seed], dtype=jnp.int32)
        out2d = _launch_simquant(seed_arr, self._grid2d, self.n_quant_bins,
                                 self._block_rows)
        return out2d.reshape(-1)[: self._n].reshape(self._shape)

    def clamp_values(self):
        kern = functools.partial(_clamp_kernel,
                                 lo=float(self.quant_left),
                                 hi=float(self.quant_right))
        self._grid2d = _launch_elementwise(kern, self._grid2d,
                                           self._block_rows, in_place=True)
        return self.grid

    def quantize_grid_and_freeze(self):
        width = (self.quant_right - self.quant_left) / self.n_quant_bins
        kern = functools.partial(
            _quantize_kernel,
            left=float(self.quant_left),
            width=float(width),
            inv_width=float(1.0 / width),
            center0=float(self.quant_left + 0.5 * width),
            n_bins=self.n_quant_bins,
        )
        self._grid2d = _launch_elementwise(kern, self._grid2d,
                                           self._block_rows, in_place=True)
        self.frozen = True   # mirrors .requires_grad_(False) in the reference
        return self.grid

    def resample(self, coordinate_start, h, w, stride,
                 support_resolution_h, support_resolution_w, quantize=False):
        # TODO(synk): `resample` is abstract (NotImplementedError) in the
        # reference base class, so the forward pass has no concrete semantics.
        raise NotImplementedError

    def __call__(self, coordinate_start, h, w, stride,
                 support_resolution_h, support_resolution_w, quantize=False):
        return self.resample(coordinate_start, h, w, stride,
                             support_resolution_h, support_resolution_w,
                             quantize=quantize)


# ----------------------------- demo / checks ---------------------------------

if __name__ == "__main__":
    C, H, W, Q = 4, 16, 16, 4
    g = GridPallas(C, H, W, Q, key=jax.random.PRNGKey(0))

    # 1) simulate_quantization: grid + U[-1/(2B), 1/(2B)) noise
    sim = g.simulate_quantization(seed=0)
    jax.block_until_ready(sim)
    noise = np.asarray(sim) - np.asarray(g.grid)
    half_bin = 1.0 / (2 * g.n_quant_bins)
    assert noise.min() >= -half_bin - 1e-6 and noise.max() <= half_bin + 1e-6

    # 2) clamp_values
    before = np.asarray(g.grid)
    clamped = g.clamp_values()
    jax.block_until_ready(clamped)
    np.testing.assert_allclose(
        np.asarray(clamped),
        np.clip(before, g.quant_left, g.quant_right),
        rtol=0, atol=1e-7)

    # 3) quantize_grid_and_freeze (bucketize -> bin centers)
    pre_q = np.asarray(g.grid)
    quantized = g.quantize_grid_and_freeze()
    jax.block_until_ready(quantized)
    edges_ref = np.linspace(g.quant_left, g.quant_right,
                            g.n_quant_bins + 1).astype(np.float64)
    centers_ref = (edges_ref[:-1] + edges_ref[1:]) / 2.0
    idx_ref = np.clip(np.searchsorted(edges_ref, pre_q, side="right") - 1,
                      0, g.n_quant_bins - 1)
    np.testing.assert_allclose(np.asarray(quantized),
                               centers_ref[idx_ref].astype(np.float32),
                               rtol=0, atol=1e-6)

    print("KERNEL_OK")
</pallas_src>

<mosaic_0001>
module attributes {stable_mosaic.version = 11 : i64} {
  func.func @_simquant_kernel(%arg0: i32, %arg1: memref<1xi32, #tpu.memory_space<smem>>, %arg2: memref<8x128xf32, #tpu.memory_space<vmem>>, %arg3: memref<8x128xf32, #tpu.memory_space<vmem>>) attributes {dimension_semantics = [#tpu.dimension_semantics<parallel>], iteration_bounds = array<i64: 1>, scalar_prefetch = 0 : i64, scratch_operands = 0 : i64, tpu.core_type = #tpu.core_type<tc>, window_params = [{transform_indices = @transform_0, window_bounds = array<i64: 1>}, {transform_indices = @transform_1, window_bounds = array<i64: 8, 128>}, {transform_indices = @transform_2, window_bounds = array<i64: 8, 128>}]} {
    %c8_i32 = arith.constant 8 : i32
    %0 = arith.muli %arg0, %c8_i32 : i32
    %1 = tpu.iota {dimensions = array<i32: 0>} : vector<8x128xi32>
    %2 = vector.broadcast %0 : i32 to vector<8x128xi32>
    %3 = arith.addi %1, %2 : vector<8x128xi32>
    %4 = tpu.iota {dimensions = array<i32: 1>} : vector<8x128xi32>
    %c128_i32 = arith.constant 128 : i32
    %5 = vector.broadcast %c128_i32 : i32 to vector<8x128xi32>
    %6 = arith.muli %3, %5 : vector<8x128xi32>
    %7 = arith.addi %6, %4 : vector<8x128xi32>
    %c0 = arith.constant 0 : index
    %8 = memref.load %arg1[%c0] : memref<1xi32, #tpu.memory_space<smem>>
    %c-1640531527_i32 = arith.constant -1640531527 : i32
    %9 = arith.muli %8, %c-1640531527_i32 : i32
    %10 = vector.broadcast %9 : i32 to vector<8x128xi32>
    %11 = arith.xori %7, %10 : vector<8x128xi32>
    %c16_i32 = arith.constant 16 : i32
    %12 = vector.broadcast %c16_i32 : i32 to vector<8x128xi32>
    %13 = arith.shrsi %11, %12 : vector<8x128xi32>
    %14 = arith.xori %11, %13 : vector<8x128xi32>
    %c2146121005_i32 = arith.constant 2146121005 : i32
    %15 = vector.broadcast %c2146121005_i32 : i32 to vector<8x128xi32>
    %16 = arith.muli %14, %15 : vector<8x128xi32>
    %c15_i32 = arith.constant 15 : i32
    %17 = vector.broadcast %c15_i32 : i32 to vector<8x128xi32>
    %18 = arith.shrsi %16, %17 : vector<8x128xi32>
    %19 = arith.xori %16, %18 : vector<8x128xi32>
    %c-2073385333_i32 = arith.constant -2073385333 : i32
    %20 = vector.broadcast %c-2073385333_i32 : i32 to vector<8x128xi32>
    %21 = arith.muli %19, %20 : vector<8x128xi32>
    %c16_i32_0 = arith.constant 16 : i32
    %22 = vector.broadcast %c16_i32_0 : i32 to vector<8x128xi32>
    %23 = arith.shrsi %21, %22 : vector<8x128xi32>
    %24 = arith.xori %21, %23 : vector<8x128xi32>
    %c16777215_i32 = arith.constant 16777215 : i32
    %25 = vector.broadcast %c16777215_i32 : i32 to vector<8x128xi32>
    %26 = arith.andi %24, %25 : vector<8x128xi32>
    %27 = arith.sitofp %26 : vector<8x128xi32> to vector<8x128xf32>
    %cst = arith.constant 5.96046448E-8 : f32
    %28 = vector.broadcast %cst : f32 to vector<8x128xf32>
    %29 = arith.mulf %27, %28 : vector<8x128xf32>
    %cst_1 = arith.constant 6.250000e-02 : f32
    %30 = vector.broadcast %cst_1 : f32 to vector<8x128xf32>
    %31 = arith.mulf %29, %30 : vector<8x128xf32>
    %cst_2 = arith.constant 3.125000e-02 : f32
    %32 = vector.broadcast %cst_2 : f32 to vector<8x128xf32>
    %33 = arith.subf %31, %32 : vector<8x128xf32>
    %c0_3 = arith.constant 0 : index
    %c0_4 = arith.constant 0 : index
    %34 = vector.load %arg2[%c0_3, %c0_4] : memref<8x128xf32, #tpu.memory_space<vmem>>, vector<8x128xf32>
    %35 = arith.addf %34, %33 : vector<8x128xf32>
    %c0_5 = arith.constant 0 : index
    %c0_6 = arith.constant 0 : index
    %36 = vector.load %arg3[%c0_5, %c0_6] : memref<8x128xf32, #tpu.memory_space<vmem>>, vector<8x128xf32>
    tpu.vector_store %arg3[%c0_5, %c0_6], %35 {strides = array<i32>} : memref<8x128xf32, #tpu.memory_space<vmem>>, vector<8x128xf32>,
    return
  }
  func.func @transform_0(%arg0: i32) -> i32 {
    %c0_i32 = arith.constant 0 : i32
    %c0_i32_0 = arith.constant 0 : i32
    return %c0_i32 : i32
  }
  func.func @transform_1(%arg0: i32) -> (i32, i32) {
    %c0_i32 = arith.constant 0 : i32
    %c0_i32_0 = arith.constant 0 : i32
    return %arg0, %c0_i32 : i32, i32
  }
  func.func @transform_2(%arg0: i32) -> (i32, i32) {
    %c0_i32 = arith.constant 0 : i32
    %c0_i32_0 = arith.constant 0 : i32
    return %arg0, %c0_i32 : i32, i32
  }
}

</mosaic_0001>

<llo_original>
// kernel: tpu_custom_call.1
$region0: #{tpu_custom_call.1}
  #allocation0 [shape = 'u32[]', space=smem, size = 0x4, offset = 0x4, fixed_abs, tag = 'smem constant byte address 0x4 - core index']
  #allocation1 [shape = 'u32[144,128]{1,0:T(1,128)}', space=vmem, size = 0x12000, scoped, tag = 'internal scratch']
  #allocation2 [shape = 's32[1]{0:T(128)S(6)}', space=smem, size = 0x200, scoped, tag = 'scoped memory for tpu_custom_call.1']
  %s0 = inlined_call_operand.<no memory space> [shape: s32[1], index: 0, kind: input, shape index: {}]
  %s1 = inlined_call_operand.hbm [shape: f32[8,128], index: 1, kind: input, shape index: {}]
  %s2 = inlined_call_operand.hbm [shape: f32[8,128], index: 2, kind: output, shape index: {}]
  %s3 = sld [smem:[#allocation0]]
  $region22: #{tpu_custom_call.1} parent=0
    _
  %s5 = ssub.s32 1, %s3
  %s6 = scalar_select 0, %s5, %s3
  %7 = sst [smem:[#allocation2]] %s0
  $region1: #{tpu_custom_call.1} parent=0
    #allocation3 [shape = 'u8[4096]{0}', space=vmem, size = 0x1000, scoped, tag = 'input window, operand 1, single buffered']
    #allocation4 [shape = 's32[1]{0}', space=sflag, size = 0x4, scoped, tag = 'scoped memory for tpu_custom_call.1']
    #allocation5 [shape = 's32[1]{0}', space=sflag, size = 0x4, scoped, tag = 'scoped memory for tpu_custom_call.1']
    #allocation6 [shape = 'u8[4096]{0}', space=vmem, size = 0x1000, scoped, tag = 'output window, operand 0, single buffered']
    %8 = vsyncpa [#allocation4], 0
    %9 = vsyncpa [#allocation5], 0
    // Predicated region
    $region2: #{tpu_custom_call.1} parent=1 // pred_check
      _
    $region3: #{tpu_custom_call.1} parent=1 // pred_check_branch
      %11 = sbr.rel (0) target = $region5
    $region4: #{tpu_custom_call.1} parent=1 // pred_region
      _
    $region5: #{tpu_custom_call.1} parent=1 // pred_fallthru
      _
    // Predicated region
    $region6: #{tpu_custom_call.1} parent=1 // pred_check
      _
    $region7: #{tpu_custom_call.1} parent=1 // pred_check_branch
      %13 = sbr.rel (0) target = $region9
    $region8: #{tpu_custom_call.1} parent=1 // pred_region
      %s15 = ssub.s32 128, 128
      %16 = vsyncadd [#allocation4], %s15
      %s18 = sshll.u32 [#allocation3], 4
      %s19 = int_to_ptr.vmem [resolvable:$true] %s18
      %21 = dma.hbm_to_vmem [thread:$0]  %s1, 128, %s19, [#allocation4]
    $region9: #{tpu_custom_call.1} parent=1 // pred_fallthru
      _
    // Predicated region
    $region10: #{tpu_custom_call.1} parent=1 // pred_check
      _
    $region11: #{tpu_custom_call.1} parent=1 // pred_check_branch
      %23 = sbr.rel (0) target = $region13
    $region12: #{tpu_custom_call.1} parent=1 // pred_region
      %24 = dma.done [#allocation4], 128
    $region13: #{tpu_custom_call.1} parent=1 // pred_fallthru
      _
    %s25 = smul.u32 0, 8
    %v26 = vlaneseq
    %v27 = vshrl.u32 %v26, 7
    %v28 = vstv %s25
    %v29 = vadd.s32 %v27, %v28
    %v30 = vlaneseq
    %v31 = vand.u32 %v30, 127
    %v32 = vmul.u32 %v29, 128
    %v33 = vadd.s32 %v32, %v31
    %s34 = sld [smem:[#allocation2]]
    %s35 = smul.u32 %s34, 2654435769
    %v36 = vstv %s35
    %v37 = vxor.u32 %v33, %v36
    %v38 = vshra.s32 %v37, 16
    %v39 = vxor.u32 %v37, %v38
    %v40 = vmul.u32 %v39, 2146121005
    %v41 = vshra.s32 %v40, 15
    %v42 = vxor.u32 %v40, %v41
    %v43 = vmul.u32 %v42, 2221581963
    %v44 = vshra.s32 %v43, 16
    %v45 = vxor.u32 %v43, %v44
    %v46 = vand.u32 %v45, 16777215
    %v47 = vcvt.s32.f32 %v46
    %v48 = vmul.f32 %v47, 5.9604645e-08
    %v49 = vmul.f32 %v48, 0.0625
    %v50 = vsub.f32 %v49, 0.03125
    %v51 = vld [vmem:[#allocation3] sm:$0xff]
    %v52 = vadd.f32 %v51, %v50
    %53 = vst [vmem:[#allocation6] sm:$0xff] %v52
    // Predicated region
    $region14: #{tpu_custom_call.1} parent=1 // pred_check
      _
    $region15: #{tpu_custom_call.1} parent=1 // pred_check_branch
      %55 = sbr.rel (0) target = $region17
    $region16: #{tpu_custom_call.1} parent=1 // pred_region
      %s57 = ssub.s32 128, 128
      %58 = vsyncadd [#allocation5], %s57
      %s60 = sshll.u32 [#allocation6], 4
      %s61 = int_to_ptr.vmem [resolvable:$true] %s60
      %63 = dma.vmem_to_hbm [thread:$0]  %s61, 128, %s2, [#allocation5]
    $region17: #{tpu_custom_call.1} parent=1 // pred_fallthru
      _
    // Predicated region
    $region18: #{tpu_custom_call.1} parent=1 // pred_check
      _
    $region19: #{tpu_custom_call.1} parent=1 // pred_check_branch
      %65 = sbr.rel (0) target = $region21
    $region20: #{tpu_custom_call.1} parent=1 // pred_region
      %66 = dma.done [#allocation5], 128
    $region21: #{tpu_custom_call.1} parent=1 // pred_fallthru
      _
    %67 = vsyncpa [#allocation4], 1
    %68 = vsyncpa [#allocation5], 1

</llo_original>
